<compile_context>
chip_gen: v5e
topology: v5e:2x2
jax: 0.10.0
libtpu: 0.0.40
codegen_flags: <defaults>
</compile_context>

<pallas_src>
import functools

import jax
import jax.numpy as jnp
from jax import lax
from jax.experimental import pallas as pl
from jax.experimental.pallas import tpu as pltpu


def _self_attention_kernel(x_ref, w_ref, b_ref, o_ref, qv_ref, kt_ref,
                           *, s_valid):
    C = x_ref.shape[1]
    Sp = x_ref.shape[2]
    tq = o_ref.shape[2]

    # ---- Per-batch prologue: fused Q/K/V projection into resident scratch.
    # The qi grid axis is "arbitrary" (not core-split), so this init runs once
    # per batch on whichever core owns that batch; the scratch carry below is
    # therefore valid on megacore parts as well.
    @pl.when(pl.program_id(1) == 0)
    def _():
        x = x_ref[0]                                            # (C, Sp)
        qkv = jnp.dot(w_ref[...], x,
                      preferred_element_type=jnp.float32) + b_ref[...]
        qkv = qkv.astype(qv_ref.dtype)                          # (3C, Sp)
        qv_ref[0:C, :] = qkv[0:C, :]                            # Q   (C, Sp)
        qv_ref[C:2 * C, :] = qkv[2 * C:3 * C, :]                # V   (C, Sp)
        kt_ref[...] = qkv[C:2 * C, :].T                         # K^T (Sp, C)

    # ---- Per query tile (K/V/K^T reused from scratch, no recompute).
    q_start = pl.multiple_of(pl.program_id(1) * tq, tq)
    q = qv_ref[0:C, pl.ds(q_start, tq)]                         # (C, tq)
    v = qv_ref[C:2 * C, :]                                      # (C, Sp)
    kt = kt_ref[...]                                            # (Sp, C)

    # scores^T[j, i] = k_j . q_i  -> (Sp, tq); canonical (Sp,C)@(C,tq) matmul.
    scores = jnp.dot(kt, q, preferred_element_type=jnp.float32)

    if s_valid < Sp:                                            # padded keys
        key_idx = lax.broadcasted_iota(jnp.int32, (Sp, tq), 0)
        scores = jnp.where(key_idx < s_valid, scores, jnp.float32(-1e30))

    # Numerically-stable softmax over the key axis (axis 0); stats kept in f32.
    m = jnp.max(scores, axis=0, keepdims=True)                  # (1, tq)
    p = jnp.exp(scores - m)                                     # (Sp, tq)
    l = jnp.sum(p, axis=0, keepdims=True)                       # (1, tq)

    # out[c, i] = (sum_j v[c, j] * p[j, i]) / l[i]; canonical (C,Sp)@(Sp,tq)
    # matmul with the normalization deferred to the small (C, tq) result.
    out = jnp.dot(v, p.astype(v.dtype), preferred_element_type=jnp.float32)
    # approx=True would use the EUP's fast reciprocal (free slot) but adds
    # ~2^-12 relative error; keep exact to hold the tight f32 tolerance.
    out = out * pl.reciprocal(l, approx=False)
    o_ref[0] = out.astype(o_ref.dtype)


@jax.jit
def self_attention_forward(x, wq, bq, wk, bk, wv, bv):
    """x: (B, C, H, W) NCHW.  wq/wk/wv: (C, C, 1, 1).  bq/bk/bv: (C,)."""
    B, C, H, W = x.shape
    S = H * W
    Sp = ((S + 127) // 128) * 128          # lane-dense spatial axis

    # Zero-copy channel-major slab (B, C, S); pad the spatial axis to a
    # multiple of 128 so all vector stores are unmasked lane-dense.  Padded
    # key positions are masked inside the kernel (bias would otherwise leak
    # into the softmax); padded query columns are sliced off below.
    x2 = x.reshape(B, C, S)
    if Sp != S:
        x2 = jnp.pad(x2, ((0, 0), (0, 0), (0, Sp - S)))

    # Fused projection: stacked weights [Wq; Wk; Wv] (3C, C) and biases (3C,1)
    # -> a single MXU matmul per batch instead of three tiny ones.
    w_all = jnp.concatenate([wq.reshape(C, C), wk.reshape(C, C),
                             wv.reshape(C, C)], axis=0)
    b_all = jnp.concatenate([bq, bk, bv]).reshape(3 * C, 1)

    # Largest 128-multiple query tile dividing Sp, capped at 512: keeps the
    # (Sp, tq) f32 scores slab small enough even for v5e's 16 MiB scoped VMEM.
    tq = 128
    for cand in (512, 384, 256, 128):
        if cand <= Sp and Sp % cand == 0:
            tq = cand
            break

    # TODO(synk): for very large H*W (where the resident Q/V + K^T scratch or
    # the (Sp, tq) scores slab exceeds the per-generation VMEM budget, e.g.
    # v7x's 64 MiB) switch to a flash-style online softmax over key tiles,
    # gated on pltpu.get_tpu_info().
    itemsize = jnp.dtype(x.dtype).itemsize
    est = (2 * C * Sp * itemsize                   # x (double-buffered)
           + 2 * (3 * C * C + 3 * C) * itemsize    # stacked weights + bias
           + 2 * C * tq * itemsize                 # output (double-buffered)
           + 4 * C * Sp * itemsize                 # Q/V + K^T scratch
           + 4 * Sp * tq * 4)                      # live f32 scores/probs
    vmem_limit = int(min(64 << 20, max(16 << 20, 2 * est)))

    wconst = lambda bi, qi: (0, 0)

    # TODO(synk): if B == 1 on v7x (2 TensorCores), add a parallel query-axis
    # split with per-core K/V recompute (or pl.core_map) so both cores get
    # work; with the scratch carry the qi axis must stay "arbitrary".
    out2 = pl.pallas_call(
        functools.partial(_self_attention_kernel, s_valid=S),
        out_shape=jax.ShapeDtypeStruct((B, C, Sp), x.dtype),
        grid_spec=pltpu.PrefetchScalarGridSpec(
            num_scalar_prefetch=0,
            grid=(B, Sp // tq),
            in_specs=[
                pl.BlockSpec((1, C, Sp), lambda bi, qi: (bi, 0, 0)),  # x
                pl.BlockSpec((3 * C, C), wconst),                     # [Wq;Wk;Wv]
                pl.BlockSpec((3 * C, 1), wconst),                     # [bq;bk;bv]
            ],
            out_specs=pl.BlockSpec((1, C, tq), lambda bi, qi: (bi, 0, qi)),
            scratch_shapes=[
                pltpu.VMEM((2 * C, Sp), x.dtype),   # Q || V (channel-major)
                pltpu.VMEM((Sp, C), x.dtype),       # K^T (hoisted transpose)
            ],
        ),
        compiler_params=pltpu.CompilerParams(
            dimension_semantics=("parallel", "arbitrary"),
            vmem_limit_bytes=vmem_limit),
    )(x2, w_all, b_all)

    if Sp != S:
        out2 = out2[:, :, :S]
    return out2.reshape(B, C, H, W)


def _reference(x, wq, bq, wk, bk, wv, bv):
    """Pure-JAX reference of the PyTorch SelfAttention forward."""
    B, C, H, W = x.shape
    S = H * W
    hi = lax.Precision.HIGHEST
    xf = x.reshape(B, C, S)

    def proj(w, b):
        return jnp.einsum("oc,bcs->bos", w.reshape(C, C), xf,
                          precision=hi) + b[None, :, None]

    q = proj(wq, bq)
    k = proj(wk, bk)
    v = proj(wv, bv)
    scores = jnp.einsum("bci,bcj->bij", q, k, precision=hi)      # (B, S, S)
    a = jax.nn.softmax(scores, axis=-1)
    out = jnp.einsum("bcj,bij->bci", v, a, precision=hi)          # (B, C, S)
    return out.reshape(B, C, H, W)


def _run_case(key, B, C, H, W):
    kx, k1, k2, k3, k4, k5, k6 = jax.random.split(key, 7)
    x = jax.random.normal(kx, (B, C, H, W), dtype=jnp.float32)
    wq = jax.random.normal(k1, (C, C, 1, 1), dtype=jnp.float32) * 0.2
    bq = jax.random.normal(k2, (C,), dtype=jnp.float32) * 0.1
    wk = jax.random.normal(k3, (C, C, 1, 1), dtype=jnp.float32) * 0.2
    bk = jax.random.normal(k4, (C,), dtype=jnp.float32) * 0.1
    wv = jax.random.normal(k5, (C, C, 1, 1), dtype=jnp.float32) * 0.2
    bv = jax.random.normal(k6, (C,), dtype=jnp.float32) * 0.1

    out = self_attention_forward(x, wq, bq, wk, bk, wv, bv)
    jax.block_until_ready(out)

    ref = _reference(x, wq, bq, wk, bk, wv, bv)
    assert out.shape == (B, C, H, W), out.shape
    assert jnp.allclose(out, ref, atol=2e-4, rtol=2e-4), float(
        jnp.max(jnp.abs(out - ref)))


if __name__ == "__main__":
    key = jax.random.PRNGKey(0)
    k_a, k_b = jax.random.split(key)

    # Main case: S = 256 (lane-aligned, no padding needed).
    _run_case(k_a, B=2, C=4, H=16, W=16)
    # Non-128-multiple spatial size: exercises the padded/masked-key path.
    _run_case(k_b, B=2, C=4, H=10, W=10)

    print("KERNEL_OK")
</pallas_src>

<mosaic_0001>
module attributes {stable_mosaic.version = 11 : i64} {
  func.func @_self_attention_kernel(%arg0: i32, %arg1: i32, %arg2: memref<1x4x256xf32, #tpu.memory_space<vmem>>, %arg3: memref<12x4xf32, #tpu.memory_space<vmem>>, %arg4: memref<12x1xf32, #tpu.memory_space<vmem>>, %arg5: memref<1x4x256xf32, #tpu.memory_space<vmem>>, %arg6: memref<8x256xf32, #tpu.memory_space<vmem>>, %arg7: memref<256x4xf32, #tpu.memory_space<vmem>>) attributes {dimension_semantics = [#tpu.dimension_semantics<parallel>, #tpu.dimension_semantics<arbitrary>], iteration_bounds = array<i64: 2, 1>, scalar_prefetch = 0 : i64, scratch_operands = 2 : i64, tpu.core_type = #tpu.core_type<tc>, window_params = [{transform_indices = @transform_0, window_bounds = array<i64: 1, 4, 256>}, {pipeline_mode = #tpu.pipeline_mode<synchronous>, transform_indices = @transform_1, window_bounds = array<i64: 12, 4>}, {pipeline_mode = #tpu.pipeline_mode<synchronous>, transform_indices = @transform_2, window_bounds = array<i64: 12, 1>}, {transform_indices = @transform_3, window_bounds = array<i64: 1, 4, 256>}]} {
    %c0_i32 = arith.constant 0 : i32
    %0 = arith.cmpi eq, %arg1, %c0_i32 : i32
    %1 = arith.extui %0 : i1 to i32
    %c0_i32_0 = arith.constant 0 : i32
    %2 = arith.cmpi ne, %1, %c0_i32_0 : i32
    scf.if %2 {
      %c0_10 = arith.constant 0 : index
      %c0_11 = arith.constant 0 : index
      %c0_12 = arith.constant 0 : index
      %24 = vector.load %arg2[%c0_10, %c0_11, %c0_12] : memref<1x4x256xf32, #tpu.memory_space<vmem>>, vector<1x4x256xf32>
      %25 = vector.shape_cast %24 : vector<1x4x256xf32> to vector<4x256xf32>
      %c0_13 = arith.constant 0 : index
      %c0_14 = arith.constant 0 : index
      %26 = vector.load %arg3[%c0_13, %c0_14] : memref<12x4xf32, #tpu.memory_space<vmem>>, vector<12x4xf32>
      %cst_15 = arith.constant dense<0.000000e+00> : vector<12x256xf32>
      %27 = tpu.matmul %26, %25, %cst_15 {dimension_numbers = #tpu.dot_dimension_numbers<[1], [0], [0], [1], [0, 0, 1, 1], [], []>} : vector<12x4xf32>, vector<4x256xf32>, vector<12x256xf32> -> vector<12x256xf32>
      %c0_16 = arith.constant 0 : index
      %c0_17 = arith.constant 0 : index
      %28 = vector.load %arg4[%c0_16, %c0_17] : memref<12x1xf32, #tpu.memory_space<vmem>>, vector<12x1xf32>
      %29 = vector.broadcast %28 : vector<12x1xf32> to vector<12x256xf32>
      %30 = arith.addf %27, %29 : vector<12x256xf32>
      %31 = vector.extract_strided_slice %30 {offsets = [0, 0], sizes = [4, 256], strides = [1, 1]} : vector<12x256xf32> to vector<4x256xf32>
      %c0_18 = arith.constant 0 : index
      %c0_19 = arith.constant 0 : index
      %32 = vector.load %arg6[%c0_18, %c0_19] : memref<8x256xf32, #tpu.memory_space<vmem>>, vector<4x256xf32>
      tpu.vector_store %arg6[%c0_18, %c0_19], %31 {strides = array<i32>} : memref<8x256xf32, #tpu.memory_space<vmem>>, vector<4x256xf32>,
      %33 = vector.extract_strided_slice %30 {offsets = [8, 0], sizes = [4, 256], strides = [1, 1]} : vector<12x256xf32> to vector<4x256xf32>
      %c4_20 = arith.constant 4 : index
      %c0_21 = arith.constant 0 : index
      %34 = vector.load %arg6[%c4_20, %c0_21] : memref<8x256xf32, #tpu.memory_space<vmem>>, vector<4x256xf32>
      tpu.vector_store %arg6[%c4_20, %c0_21], %33 {strides = array<i32>} : memref<8x256xf32, #tpu.memory_space<vmem>>, vector<4x256xf32>,
      %35 = vector.extract_strided_slice %30 {offsets = [4, 0], sizes = [4, 256], strides = [1, 1]} : vector<12x256xf32> to vector<4x256xf32>
      %36 = tpu.transpose %35, [1, 0] : vector<4x256xf32> -> vector<256x4xf32>
      %c0_22 = arith.constant 0 : index
      %c0_23 = arith.constant 0 : index
      %37 = vector.load %arg7[%c0_22, %c0_23] : memref<256x4xf32, #tpu.memory_space<vmem>>, vector<256x4xf32>
      tpu.vector_store %arg7[%c0_22, %c0_23], %36 {strides = array<i32>} : memref<256x4xf32, #tpu.memory_space<vmem>>, vector<256x4xf32>,
    } else {
    }
    %c256_i32 = arith.constant 256 : i32
    %3 = arith.muli %arg1, %c256_i32 : i32
    %4 = tpu.assume_multiple %3, 256 : i32
    %c0 = arith.constant 0 : index
    %5 = arith.index_cast %4 : i32 to index
    %6 = vector.load %arg6[%c0, %5] : memref<8x256xf32, #tpu.memory_space<vmem>>, vector<4x256xf32>
    %c4 = arith.constant 4 : index
    %c0_1 = arith.constant 0 : index
    %7 = vector.load %arg6[%c4, %c0_1] : memref<8x256xf32, #tpu.memory_space<vmem>>, vector<4x256xf32>
    %c0_2 = arith.constant 0 : index
    %c0_3 = arith.constant 0 : index
    %8 = vector.load %arg7[%c0_2, %c0_3] : memref<256x4xf32, #tpu.memory_space<vmem>>, vector<256x4xf32>
    %cst = arith.constant dense<0.000000e+00> : vector<256x256xf32>
    %9 = tpu.matmul %8, %6, %cst {dimension_numbers = #tpu.dot_dimension_numbers<[1], [0], [0], [1], [0, 0, 1, 1], [], []>} : vector<256x4xf32>, vector<4x256xf32>, vector<256x256xf32> -> vector<256x256xf32>
    %cst_4 = arith.constant dense<0xFF800000> : vector<256xf32>
    %10 = vector.multi_reduction <maximumf>, %9, %cst_4 [0] : vector<256x256xf32> to vector<256xf32>
    %11 = vector.shape_cast %10 : vector<256xf32> to vector<1x256xf32>
    %12 = vector.broadcast %11 : vector<1x256xf32> to vector<256x256xf32>
    %13 = arith.subf %9, %12 : vector<256x256xf32>
    %14 = math.exp %13 : vector<256x256xf32>
    %cst_5 = arith.constant dense<0.000000e+00> : vector<256xf32>
    %15 = vector.multi_reduction <add>, %14, %cst_5 [0] : vector<256x256xf32> to vector<256xf32>
    %16 = vector.shape_cast %15 : vector<256xf32> to vector<1x256xf32>
    %cst_6 = arith.constant dense<0.000000e+00> : vector<4x256xf32>
    %17 = tpu.matmul %7, %14, %cst_6 {dimension_numbers = #tpu.dot_dimension_numbers<[1], [0], [0], [1], [0, 0, 1, 1], [], []>} : vector<4x256xf32>, vector<256x256xf32>, vector<4x256xf32> -> vector<4x256xf32>
    %18 = tpu.reciprocal %16 : vector<1x256xf32> -> vector<1x256xf32>
    %19 = vector.broadcast %18 : vector<1x256xf32> to vector<4x256xf32>
    %20 = arith.mulf %17, %19 : vector<4x256xf32>
    %c0_7 = arith.constant 0 : index
    %c0_8 = arith.constant 0 : index
    %c0_9 = arith.constant 0 : index
    %21 = vector.load %arg5[%c0_7, %c0_8, %c0_9] : memref<1x4x256xf32, #tpu.memory_space<vmem>>, vector<1x4x256xf32>
    %22 = vector.shape_cast %21 : vector<1x4x256xf32> to vector<4x256xf32>
    %23 = vector.shape_cast %20 : vector<4x256xf32> to vector<1x4x256xf32>
    tpu.vector_store %arg5[%c0_7, %c0_8, %c0_9], %23 {strides = array<i32>} : memref<1x4x256xf32, #tpu.memory_space<vmem>>, vector<1x4x256xf32>,
    return
  }
  func.func @transform_0(%arg0: i32, %arg1: i32) -> (i32, i32, i32) {
    %c0_i32 = arith.constant 0 : i32
    %c0_i32_0 = arith.constant 0 : i32
    %c0_i32_1 = arith.constant 0 : i32
    return %arg0, %c0_i32, %c0_i32_0 : i32, i32, i32
  }
  func.func @transform_1(%arg0: i32, %arg1: i32) -> (i32, i32) {
    %c0_i32 = arith.constant 0 : i32
    %c0_i32_0 = arith.constant 0 : i32
    %c0_i32_1 = arith.constant 0 : i32
    return %c0_i32, %c0_i32_0 : i32, i32
  }
  func.func @transform_2(%arg0: i32, %arg1: i32) -> (i32, i32) {
    %c0_i32 = arith.constant 0 : i32
    %c0_i32_0 = arith.constant 0 : i32
    %c0_i32_1 = arith.constant 0 : i32
    return %c0_i32, %c0_i32_0 : i32, i32
  }
  func.func @transform_3(%arg0: i32, %arg1: i32) -> (i32, i32, i32) {
    %c0_i32 = arith.constant 0 : i32
    %c0_i32_0 = arith.constant 0 : i32
    return %arg0, %c0_i32, %arg1 : i32, i32, i32
  }
}

</mosaic_0001>

<llo_original>
// kernel: self_attention_forward.1
$region0: #{self_attention_forward.1}
  #allocation0 [shape = 'u32[]', space=smem, size = 0x4, offset = 0x4, fixed_abs, tag = 'smem constant byte address 0x4 - core index']
  #allocation1 [shape = 'u32[72,128]{1,0:T(1,128)}', space=vmem, size = 0x9000, scoped, tag = 'internal scratch']
  #allocation2 [shape = 'f32[8,256]{1,0:T(8,128)}', space=vmem, size = 0x2000, scoped, tag = 'scratch operand']
  #allocation3 [shape = 'f32[256,4]{1,0:T(8,128)}', space=vmem, size = 0x20000, scoped, tag = 'scratch operand']
  %s0 = inlined_call_operand.vmem [shape: f32[2,4,256], index: 0, kind: input, shape index: {}]
  %s1 = inlined_call_operand.vmem [shape: f32[12,4], index: 1, kind: input, shape index: {}]
  %s2 = inlined_call_operand.vmem [shape: f32[12,1], index: 2, kind: input, shape index: {}]
  %s3 = inlined_call_operand.vmem [shape: f32[2,4,256], index: 3, kind: output, shape index: {}]
  %s4 = sld [smem:[#allocation0]]
  $region49: #{self_attention_forward.1} parent=0
    _
  %s6 = ssub.s32 1, %s4
  %s7 = scalar_select 0, %s6, %s4
  loop: start=0, step=1, limit=4
  $region2: #{self_attention_forward.1} parent=0 // loop_pre_header
    _
  $region3: #{self_attention_forward.1} parent=0 // loop_header
    %s9 = sphi 0, %s13
    %p10 = scmp.ge.s32.totalorder %s9, 4
    %s16 = sphi 0, %s28
    %s17 = sphi 0, %s24
    %s18 = sphi 0, %s16
    %s19 = sphi 0, %s17
    %s20 = sphi 0, %s18
    %s21 = sphi 0, %s19
    %s31 = sphi 0, %s33
    %s34 = sphi 0, %s31
    %s35 = sphi 0, %s34
    %s51 = sphi 0, %s35
    %s55 = sphi 0, %s55
    %s57 = sphi 0, %s55
    %s58 = sphi 0, %s57
    %s72 = sphi 0, %s58
    %s76 = sphi 0, %s76
    %s78 = sphi 0, %s76
    %s79 = sphi 0, %s78
    %s93 = sphi 0, %s79
    %s101 = sphi 0, %s103
    %s104 = sphi 0, %s101
    %s105 = sphi 0, %s104
    %s121 = sphi 0, %s105
  $region4: #{self_attention_forward.1} parent=0 // loop_header_branch
    %12 = sbr.rel (%p10) target = $region8
  $region5: #{self_attention_forward.1} parent=0 // loop_body
    %s14 = ssub.s32 %s9, 1
    %s15 = ssub.s32 %s9, 2
    %s22 = sadd.s32 1, %s17
    %p23 = scmp.ge.s32.totalorder %s22, 1
    %s24 = scalar_select %p23, 0, %s22
    %s25 = sadd.s32 1, %s16
    %s26 = scalar_select %p23, %s25, %s16
    %p27 = scmp.ge.s32.totalorder %s26, 2
    %s28 = scalar_select %p27, 0, %s26
    %s29 = ssub.s32 %s16, %s28
    %p30 = scmp.eq.s32.totalorder %s29, 0
    %s32 = sadd.s32 %s31, 1
    %s33 = scalar_select %p30, %s31, %s32
    %p36 = pneg %p30
    %p37 = scmp.eq.s32.totalorder %s9, 1
    %p38 = por %p36, %p37
    %p39 = scmp.ne.s32.totalorder %s31, %s34
    %p40 = scmp.eq.s32.totalorder %s9, 0
    %p41 = por %p39, %p40
    %p42 = scmp.ne.s32.totalorder %s31, %s34
    %p43 = scmp.eq.s32.totalorder %s14, 1
    %p44 = por %p42, %p43
    %p45 = scmp.ne.s32.totalorder %s34, %s35
    %p46 = scmp.eq.s32.totalorder %s14, 0
    %p47 = por %p45, %p46
    %p48 = scmp.ne.s32.totalorder %s34, %s35
    %p49 = scmp.eq.s32.totalorder %s15, 1
    %p50 = por %p48, %p49
    %p52 = scmp.ne.s32.totalorder %s35, %s51
    %p53 = scmp.eq.s32.totalorder %s15, 0
    %p54 = por %p52, %p53
    %s56 = sadd.s32 %s55, 1
    %p59 = scmp.eq.s32.totalorder %s9, 1
    %p60 = scmp.ne.s32.totalorder %s55, %s57
    %p61 = scmp.eq.s32.totalorder %s9, 0
    %p62 = por %p60, %p61
    %p63 = scmp.ne.s32.totalorder %s55, %s57
    %p64 = scmp.eq.s32.totalorder %s14, 1
    %p65 = por %p63, %p64
    %p66 = scmp.ne.s32.totalorder %s57, %s58
    %p67 = scmp.eq.s32.totalorder %s14, 0
    %p68 = por %p66, %p67
    %p69 = scmp.ne.s32.totalorder %s57, %s58
    %p70 = scmp.eq.s32.totalorder %s15, 1
    %p71 = por %p69, %p70
    %p73 = scmp.ne.s32.totalorder %s58, %s72
    %p74 = scmp.eq.s32.totalorder %s15, 0
    %p75 = por %p73, %p74
    %s77 = sadd.s32 %s76, 1
    %p80 = scmp.eq.s32.totalorder %s9, 1
    %p81 = scmp.ne.s32.totalorder %s76, %s78
    %p82 = scmp.eq.s32.totalorder %s9, 0
    %p83 = por %p81, %p82
    %p84 = scmp.ne.s32.totalorder %s76, %s78
    %p85 = scmp.eq.s32.totalorder %s14, 1
    %p86 = por %p84, %p85
    %p87 = scmp.ne.s32.totalorder %s78, %s79
    %p88 = scmp.eq.s32.totalorder %s14, 0
    %p89 = por %p87, %p88
    %p90 = scmp.ne.s32.totalorder %s78, %s79
    %p91 = scmp.eq.s32.totalorder %s15, 1
    %p92 = por %p90, %p91
    %p94 = scmp.ne.s32.totalorder %s79, %s93
    %p95 = scmp.eq.s32.totalorder %s15, 0
    %p96 = por %p94, %p95
    %s97 = ssub.s32 %s16, %s28
    %s98 = ssub.s32 %s17, %s24
    %s99 = sor.u32 %s97, %s98
    %p100 = scmp.eq.s32.totalorder %s99, 0
    %s102 = sadd.s32 %s101, 1
    %s103 = scalar_select %p100, %s101, %s102
    %p106 = pneg %p100
    %p107 = scmp.eq.s32.totalorder %s9, 1
    %p108 = por %p106, %p107
    %p109 = scmp.ne.s32.totalorder %s101, %s104
    %p110 = scmp.eq.s32.totalorder %s9, 0
    %p111 = por %p109, %p110
    %p112 = scmp.ne.s32.totalorder %s101, %s104
    %p113 = scmp.eq.s32.totalorder %s14, 1
    %p114 = por %p112, %p113
    %p115 = scmp.ne.s32.totalorder %s104, %s105
    %p116 = scmp.eq.s32.totalorder %s14, 0
    %p117 = por %p115, %p116
    %p118 = scmp.ne.s32.totalorder %s104, %s105
    %p119 = scmp.eq.s32.totalorder %s15, 1
    %p120 = por %p118, %p119
    %p122 = scmp.ne.s32.totalorder %s105, %s121
    %p123 = scmp.eq.s32.totalorder %s15, 0
    %p124 = por %p122, %p123
    %p125 = scmp.le.s32.totalorder 1, %s9
    %p126 = scmp.lt.s32.totalorder %s9, 3
    %p127 = pnand %p125, %p126
    %p128 = pneg %p127
    // Predicated region
    $region9: #{self_attention_forward.1} parent=5 // pred_check
      _
    $region10: #{self_attention_forward.1} parent=5 // pred_check_branch
      %130 = sbr.rel (%p127) target = $region12
    $region11: #{self_attention_forward.1} parent=5 // pred_region
      %s131 = ssub.s32 %s9, 1
      // Predicated region
      $region13: #{self_attention_forward.1} parent=11 // pred_check
        %p132 = pneg %p68
      $region14: #{self_attention_forward.1} parent=11 // pred_check_branch
        %134 = sbr.rel (%p132) target = $region16
      $region15: #{self_attention_forward.1} parent=11 // pred_region
        _
      $region16: #{self_attention_forward.1} parent=11 // pred_fallthru
        _
      // Predicated region
      $region17: #{self_attention_forward.1} parent=11 // pred_check
        %p135 = pneg %p89
      $region18: #{self_attention_forward.1} parent=11 // pred_check_branch
        %137 = sbr.rel (%p135) target = $region20
      $region19: #{self_attention_forward.1} parent=11 // pred_region
        _
      $region20: #{self_attention_forward.1} parent=11 // pred_fallthru
        _
    $region12: #{self_attention_forward.1} parent=5 // pred_fallthru
      _
    %p138 = scmp.lt.s32.totalorder %s9, 2
    // Predicated region
    $region21: #{self_attention_forward.1} parent=5 // pred_check
      %p139 = pneg %p138
    $region22: #{self_attention_forward.1} parent=5 // pred_check_branch
      %141 = sbr.rel (%p139) target = $region24
    $region23: #{self_attention_forward.1} parent=5 // pred_region
      // Predicated region
      $region25: #{self_attention_forward.1} parent=23 // pred_check
        %p142 = pneg %p41
      $region26: #{self_attention_forward.1} parent=23 // pred_check_branch
        %144 = sbr.rel (%p142) target = $region28
      $region27: #{self_attention_forward.1} parent=23 // pred_region
        %p145 = scmp.lt.s32.totalorder %s16, 1
        %s146 = scalar_select %p145, %s16, 1
        %s147 = smul.addr %s146, 2
        %s148 = smul.addr %s147, 4
        %s149 = scalar_lea.vmem %s0, %s148
      $region28: #{self_attention_forward.1} parent=23 // pred_fallthru
        _
    $region24: #{self_attention_forward.1} parent=5 // pred_fallthru
      _
    %p150 = scmp.le.s32.totalorder 1, %s9
    %p151 = scmp.lt.s32.totalorder %s9, 3
    %p152 = pnand %p150, %p151
    %p153 = pneg %p152
    // Predicated region
    $region29: #{self_attention_forward.1} parent=5 // pred_check
      _
    $region30: #{self_attention_forward.1} parent=5 // pred_check_branch
      %155 = sbr.rel (%p152) target = $region32
    $region31: #{self_attention_forward.1} parent=5 // pred_region
      %s156 = ssub.s32 %s9, 1
      %p157 = scmp.lt.s32.totalorder %s18, 1
      %s158 = scalar_select %p157, %s18, 1
      %s159 = smul.addr %s158, 2
      %s160 = smul.addr %s159, 4
      %s161 = scalar_lea.vmem %s0, %s160
      %p162 = pneg %p47
      %p163 = pneg %p44
      %p164 = pneg %p68
      %p165 = pneg %p65
      %p166 = pneg %p89
      %p167 = pneg %p86
      %p168 = pneg %p117
      %p169 = pneg %p114
      %s170 = smul.u32 2, %s19
      %p171 = scmp.lt.s32.totalorder %s18, 1
      %s172 = scalar_select %p171, %s18, 1
      %p173 = scmp.lt.s32.totalorder %s170, 1
      %s174 = scalar_select %p173, %s170, 1
      %s175 = smul.addr %s172, 2
      %s176 = sadd.s32 %s174, %s175
      %s177 = smul.addr %s176, 4
      %s178 = scalar_lea.vmem %s3, %s177
      %p179 = scmp.lt.s32.totalorder %s18, 1
      %s180 = scalar_select %p179, %s18, 1
      %s181 = smul.addr %s180, 2
      %s182 = smul.addr %s181, 4
      %s183 = scalar_lea.vmem %s0, %s182
      %s184 = smul.u32 2, %s19
      %p185 = scmp.lt.s32.totalorder %s18, 1
      %s186 = scalar_select %p185, %s18, 1
      %p187 = scmp.lt.s32.totalorder %s184, 1
      %s188 = scalar_select %p187, %s184, 1
      %s189 = smul.addr %s186, 2
      %s190 = sadd.s32 %s188, %s189
      %s191 = smul.addr %s190, 4
      %s192 = scalar_lea.vmem %s3, %s191
      %s193 = smul.u32 2, %s19
      %p194 = scmp.eq.s32.totalorder %s19, 0
      // Predicated region
      $region33: #{self_attention_forward.1} parent=31 // pred_check
        %p195 = pneg %p194
      $region34: #{self_attention_forward.1} parent=31 // pred_check_branch
        %197 = sbr.rel (%p195) target = $region36
      $region35: #{self_attention_forward.1} parent=31 // pred_region
        %v198 = vld [vmem:[%s183] sm:$0xff]
        %v199 = vld [vmem:[%s1] sm:$0xff]
        %v200 = vld [vmem:[%s1 + $0x8] sm:$0xf]
        %v201 = vld [vmem:[%s2] sm:$0xff]
        %v202 = vld [vmem:[%s2 + $0x8] sm:$0xf]
        %204 = vset.pattern.permute.xlu0 0
        %205 = vperm.xlu0 %204, %v201
        %v206 = vpop.permute.xlu0 %205
        %209 = vset.pattern.permute.xlu0 0
        %210 = vperm.xlu0 %209, %v202
        %v211 = vpop.permute.xlu0 %210
        %214 = vst [vmem:[#allocation1] ss:$2 sm:$0xff] %v198
        %v215 = vld.sshfl [vmem:[#allocation1] sm:$0xff pattern:$0x75316420]
        %v216 = vld.sshfl [vmem:[#allocation1 + $0x8] sm:$0xff pattern:$0x75316420]
        %vm217 = vcmask 31744
        %v219 = vsel %vm217, %v199, 0
        %v222 = vsel %vm217, %v200, 0
        %vm224 = vcmask 1043456
        %v225 = vsel %vm224, %v215, 0
        %v227 = vsel %vm224, %v216, 0
        %229 = vmatpush.msra.mxu0 0.0
        %230 = vmatpush.msra.mxu0 0.0
        %231 = vmatpush.msra.mxu0 0.0
        %232 = vmatpush.msra.mxu0 0.0
        %233 = vmatpush.msra.mxu0 0.0
        %234 = vmatpush.msra.mxu0 0.0
        %235 = vmatpush.msra.mxu0 0.0
        %236 = vmatpush.msra.mxu0 0.0
        %237 = vmatpush.msra.mxu0 0.0
        %238 = vmatpush.msra.mxu0 0.0
        %239 = vmatpush.msra.mxu0 0.0
        %240 = vmatpush.msra.mxu0 0.0
        %241 = vmatpush.msra.mxu0 0.0
        %242 = vmatpush.msra.mxu0 0.0
        %243 = vmatpush.msra.mxu0 0.0
        %244 = vmatpush.msra.mxu0 %v225
        %245 = vmatmul.f32.gmra.mxu0 %v219
        %v246 = vpop.f32.mrf.mxu0
        %v247 = vadd.f32 %v206, %v246
        %248 = vmatmul.f32.gmra.mxu0 %v222
        %v249 = vpop.f32.mrf.mxu0
        %v250 = vadd.f32 %v211, %v249
        %251 = vdwg.mxu0
        %252 = vmatpush.msra.mxu0 0.0
        %253 = vmatpush.msra.mxu0 0.0
        %254 = vmatpush.msra.mxu0 0.0
        %255 = vmatpush.msra.mxu0 0.0
        %256 = vmatpush.msra.mxu0 0.0
        %257 = vmatpush.msra.mxu0 0.0
        %258 = vmatpush.msra.mxu0 0.0
        %259 = vmatpush.msra.mxu0 0.0
        %260 = vmatpush.msra.mxu0 0.0
        %261 = vmatpush.msra.mxu0 0.0
        %262 = vmatpush.msra.mxu0 0.0
        %263 = vmatpush.msra.mxu0 0.0
        %264 = vmatpush.msra.mxu0 0.0
        %265 = vmatpush.msra.mxu0 0.0
        %266 = vmatpush.msra.mxu0 0.0
        %267 = vmatpush.msra.mxu0 %v227
        %268 = vmatmul.f32.gmra.mxu0 %v219
        %v269 = vpop.f32.mrf.mxu0
        %v270 = vadd.f32 %v206, %v269
        %271 = vmatmul.f32.gmra.mxu0 %v222
        %v272 = vpop.f32.mrf.mxu0
        %v273 = vadd.f32 %v211, %v272
        %274 = vdwg.mxu0
        %275 = vst [vmem:[#allocation2] sm:$0xf] %v247
        %276 = vst [vmem:[#allocation2 + $0x8] sm:$0xf] %v270
        %v279 = vrot.slane %v250, 4
        %v280 = vrot.slane %v273, 4
        %283 = vst [vmem:[#allocation2] sm:$0xf0] %v279
        %284 = vst [vmem:[#allocation2 + $0x8] sm:$0xf0] %v280
        %v287 = vrot.slane %v247, 4
        %v288 = vrot.slane %v270, 4
        %291 = vxpose.xlu0.b32.start [1/16] %v287, 128
        %292 = vxpose.xlu0.b32.cont [2/16] 0.0, 128
        %293 = vxpose.xlu0.b32.cont [3/16] 0.0, 128
        %294 = vxpose.xlu0.b32.cont [4/16] 0.0, 128
        %295 = vxpose.xlu0.b32.cont [5/16] 0.0, 128
        %296 = vxpose.xlu0.b32.cont [6/16] 0.0, 128
        %297 = vxpose.xlu0.b32.cont [7/16] 0.0, 128
        %298 = vxpose.xlu0.b32.cont [8/16] 0.0, 128
        %299 = vxpose.xlu0.b32.cont [9/16] 0.0, 128
        %300 = vxpose.xlu0.b32.cont [10/16] 0.0, 128
        %301 = vxpose.xlu0.b32.cont [11/16] 0.0, 128
        %302 = vxpose.xlu0.b32.cont [12/16] 0.0, 128
        %303 = vxpose.xlu0.b32.cont [13/16] 0.0, 128
        %304 = vxpose.xlu0.b32.cont [14/16] 0.0, 128
        %305 = vxpose.xlu0.b32.cont [15/16] 0.0, 128
        %306 = vxpose.xlu0.b32.end [16/16] 0.0, 128
        %v307 = vpop.trf.xlu0
        %v308 = vpop.trf.xlu0
        %v309 = vpop.trf.xlu0
        %v310 = vpop.trf.xlu0
        %v311 = vpop.trf.xlu0
        %v312 = vpop.trf.xlu0
        %v313 = vpop.trf.xlu0
        %v314 = vpop.trf.xlu0
        %v315 = vpop.trf.xlu0
        %v316 = vpop.trf.xlu0
        %v317 = vpop.trf.xlu0
        %v318 = vpop.trf.xlu0
        %v319 = vpop.trf.xlu0
        %v320 = vpop.trf.xlu0
        %v321 = vpop.trf.xlu0
        %v322 = vpop.trf.xlu0
        %323 = vxpose.xlu0.b32.start [1/16] %v288, 128
        %324 = vxpose.xlu0.b32.cont [2/16] 0.0, 128
        %325 = vxpose.xlu0.b32.cont [3/16] 0.0, 128
        %326 = vxpose.xlu0.b32.cont [4/16] 0.0, 128
        %327 = vxpose.xlu0.b32.cont [5/16] 0.0, 128
        %328 = vxpose.xlu0.b32.cont [6/16] 0.0, 128
        %329 = vxpose.xlu0.b32.cont [7/16] 0.0, 128
        %330 = vxpose.xlu0.b32.cont [8/16] 0.0, 128
        %331 = vxpose.xlu0.b32.cont [9/16] 0.0, 128
        %332 = vxpose.xlu0.b32.cont [10/16] 0.0, 128
        %333 = vxpose.xlu0.b32.cont [11/16] 0.0, 128
        %334 = vxpose.xlu0.b32.cont [12/16] 0.0, 128
        %335 = vxpose.xlu0.b32.cont [13/16] 0.0, 128
        %336 = vxpose.xlu0.b32.cont [14/16] 0.0, 128
        %337 = vxpose.xlu0.b32.cont [15/16] 0.0, 128
        %338 = vxpose.xlu0.b32.end [16/16] 0.0, 128
        %v339 = vpop.trf.xlu0
        %v340 = vpop.trf.xlu0
        %v341 = vpop.trf.xlu0
        %v342 = vpop.trf.xlu0
        %v343 = vpop.trf.xlu0
        %v344 = vpop.trf.xlu0
        %v345 = vpop.trf.xlu0
        %v346 = vpop.trf.xlu0
        %v347 = vpop.trf.xlu0
        %v348 = vpop.trf.xlu0
        %v349 = vpop.trf.xlu0
        %v350 = vpop.trf.xlu0
        %v351 = vpop.trf.xlu0
        %v352 = vpop.trf.xlu0
        %v353 = vpop.trf.xlu0
        %v354 = vpop.trf.xlu0
        %355 = vst.msk [vmem:[#allocation3] sm:$0xff] %vm217, %v307
        %356 = vst.msk [vmem:[#allocation3 + $0x8] sm:$0xff] %vm217, %v308
        %357 = vst.msk [vmem:[#allocation3 + $0x10] sm:$0xff] %vm217, %v309
        %358 = vst.msk [vmem:[#allocation3 + $0x18] sm:$0xff] %vm217, %v310
        %359 = vst.msk [vmem:[#allocation3 + $0x20] sm:$0xff] %vm217, %v311
        %360 = vst.msk [vmem:[#allocation3 + $0x28] sm:$0xff] %vm217, %v312
        %361 = vst.msk [vmem:[#allocation3 + $0x30] sm:$0xff] %vm217, %v313
        %362 = vst.msk [vmem:[#allocation3 + $0x38] sm:$0xff] %vm217, %v314
        %363 = vst.msk [vmem:[#allocation3 + $0x40] sm:$0xff] %vm217, %v315
        %364 = vst.msk [vmem:[#allocation3 + $0x48] sm:$0xff] %vm217, %v316
        %365 = vst.msk [vmem:[#allocation3 + $0x50] sm:$0xff] %vm217, %v317
        %366 = vst.msk [vmem:[#allocation3 + $0x58] sm:$0xff] %vm217, %v318
        %367 = vst.msk [vmem:[#allocation3 + $0x60] sm:$0xff] %vm217, %v319
        %368 = vst.msk [vmem:[#allocation3 + $0x68] sm:$0xff] %vm217, %v320
        %369 = vst.msk [vmem:[#allocation3 + $0x70] sm:$0xff] %vm217, %v321
        %370 = vst.msk [vmem:[#allocation3 + $0x78] sm:$0xff] %vm217, %v322
        %371 = vst.msk [vmem:[#allocation3 + $0x80] sm:$0xff] %vm217, %v339
        %372 = vst.msk [vmem:[#allocation3 + $0x88] sm:$0xff] %vm217, %v340
        %373 = vst.msk [vmem:[#allocation3 + $0x90] sm:$0xff] %vm217, %v341
        %374 = vst.msk [vmem:[#allocation3 + $0x98] sm:$0xff] %vm217, %v342
        %375 = vst.msk [vmem:[#allocation3 + $0xa0] sm:$0xff] %vm217, %v343
        %376 = vst.msk [vmem:[#allocation3 + $0xa8] sm:$0xff] %vm217, %v344
        %377 = vst.msk [vmem:[#allocation3 + $0xb0] sm:$0xff] %vm217, %v345
        %378 = vst.msk [vmem:[#allocation3 + $0xb8] sm:$0xff] %vm217, %v346
        %379 = vst.msk [vmem:[#allocation3 + $0xc0] sm:$0xff] %vm217, %v347
        %380 = vst.msk [vmem:[#allocation3 + $0xc8] sm:$0xff] %vm217, %v348
        %381 = vst.msk [vmem:[#allocation3 + $0xd0] sm:$0xff] %vm217, %v349
        %382 = vst.msk [vmem:[#allocation3 + $0xd8] sm:$0xff] %vm217, %v350
        %383 = vst.msk [vmem:[#allocation3 + $0xe0] sm:$0xff] %vm217, %v351
        %384 = vst.msk [vmem:[#allocation3 + $0xe8] sm:$0xff] %vm217, %v352
        %385 = vst.msk [vmem:[#allocation3 + $0xf0] sm:$0xff] %vm217, %v353
        %386 = vst.msk [vmem:[#allocation3 + $0xf8] sm:$0xff] %vm217, %v354
      $region36: #{self_attention_forward.1} parent=31 // pred_fallthru
        _
      %s387 = smul.u32 %s19, 256
      %s388 = sshra.s32 %s387, 7
      %s389 = sand.u32 %s387, 127
      %s390 = smul.addr %s388, 8
      %s391 = scalar_lea.vmem [#allocation2], %s390
      %v392 = vld [vmem:[%s391] sm:$0xf]
      %v393 = vld [vmem:[%s391 + $0x8] sm:$0xf]
      %v394 = vld [vmem:[#allocation2] sm:$0xf0]
      %v395 = vld [vmem:[#allocation2 + $0x8] sm:$0xf0]
      %v396 = vld [vmem:[#allocation3] sm:$0xff]
      %v397 = vld [vmem:[#allocation3 + $0x8] sm:$0xff]
      %v398 = vld [vmem:[#allocation3 + $0x10] sm:$0xff]
      %v399 = vld [vmem:[#allocation3 + $0x18] sm:$0xff]
      %v400 = vld [vmem:[#allocation3 + $0x20] sm:$0xff]
      %v401 = vld [vmem:[#allocation3 + $0x28] sm:$0xff]
      %v402 = vld [vmem:[#allocation3 + $0x30] sm:$0xff]
      %v403 = vld [vmem:[#allocation3 + $0x38] sm:$0xff]
      %v404 = vld [vmem:[#allocation3 + $0x40] sm:$0xff]
      %v405 = vld [vmem:[#allocation3 + $0x48] sm:$0xff]
      %v406 = vld [vmem:[#allocation3 + $0x50] sm:$0xff]
      %v407 = vld [vmem:[#allocation3 + $0x58] sm:$0xff]
      %v408 = vld [vmem:[#allocation3 + $0x60] sm:$0xff]
      %v409 = vld [vmem:[#allocation3 + $0x68] sm:$0xff]
      %v410 = vld [vmem:[#allocation3 + $0x70] sm:$0xff]
      %v411 = vld [vmem:[#allocation3 + $0x78] sm:$0xff]
      %v412 = vld [vmem:[#allocation3 + $0x80] sm:$0xff]
      %v413 = vld [vmem:[#allocation3 + $0x88] sm:$0xff]
      %v414 = vld [vmem:[#allocation3 + $0x90] sm:$0xff]
      %v415 = vld [vmem:[#allocation3 + $0x98] sm:$0xff]
      %v416 = vld [vmem:[#allocation3 + $0xa0] sm:$0xff]
      %v417 = vld [vmem:[#allocation3 + $0xa8] sm:$0xff]
      %v418 = vld [vmem:[#allocation3 + $0xb0] sm:$0xff]
      %v419 = vld [vmem:[#allocation3 + $0xb8] sm:$0xff]
      %v420 = vld [vmem:[#allocation3 + $0xc0] sm:$0xff]
      %v421 = vld [vmem:[#allocation3 + $0xc8] sm:$0xff]
      %v422 = vld [vmem:[#allocation3 + $0xd0] sm:$0xff]
      %v423 = vld [vmem:[#allocation3 + $0xd8] sm:$0xff]
      %v424 = vld [vmem:[#allocation3 + $0xe0] sm:$0xff]
      %v425 = vld [vmem:[#allocation3 + $0xe8] sm:$0xff]
      %v426 = vld [vmem:[#allocation3 + $0xf0] sm:$0xff]
      %v427 = vld [vmem:[#allocation3 + $0xf8] sm:$0xff]
      %vm428 = vcmask 31744
      %v430 = vsel %vm428, %v396, 0
      %v433 = vsel %vm428, %v397, 0
      %v436 = vsel %vm428, %v398, 0
      %v439 = vsel %vm428, %v399, 0
      %v442 = vsel %vm428, %v400, 0
      %v445 = vsel %vm428, %v401, 0
      %v448 = vsel %vm428, %v402, 0
      %v451 = vsel %vm428, %v403, 0
      %v454 = vsel %vm428, %v404, 0
      %v457 = vsel %vm428, %v405, 0
      %v460 = vsel %vm428, %v406, 0
      %v463 = vsel %vm428, %v407, 0
      %v466 = vsel %vm428, %v408, 0
      %v469 = vsel %vm428, %v409, 0
      %v472 = vsel %vm428, %v410, 0
      %v475 = vsel %vm428, %v411, 0
      %v478 = vsel %vm428, %v412, 0
      %v481 = vsel %vm428, %v413, 0
      %v484 = vsel %vm428, %v414, 0
      %v487 = vsel %vm428, %v415, 0
      %v490 = vsel %vm428, %v416, 0
      %v493 = vsel %vm428, %v417, 0
      %v496 = vsel %vm428, %v418, 0
      %v499 = vsel %vm428, %v419, 0
      %v502 = vsel %vm428, %v420, 0
      %v505 = vsel %vm428, %v421, 0
      %v508 = vsel %vm428, %v422, 0
      %v511 = vsel %vm428, %v423, 0
      %v514 = vsel %vm428, %v424, 0
      %v517 = vsel %vm428, %v425, 0
      %v520 = vsel %vm428, %v426, 0
      %v523 = vsel %vm428, %v427, 0
      %vm525 = vcmask 1043456
      %v527 = vsel %vm525, %v392, 0
      %v530 = vsel %vm525, %v393, 0
      %532 = vmatpush.msra.mxu0 0.0
      %533 = vmatpush.msra.mxu0 0.0
      %534 = vmatpush.msra.mxu0 0.0
      %535 = vmatpush.msra.mxu0 0.0
      %536 = vmatpush.msra.mxu0 0.0
      %537 = vmatpush.msra.mxu0 0.0
      %538 = vmatpush.msra.mxu0 0.0
      %539 = vmatpush.msra.mxu0 0.0
      %540 = vmatpush.msra.mxu0 0.0
      %541 = vmatpush.msra.mxu0 0.0
      %542 = vmatpush.msra.mxu0 0.0
      %543 = vmatpush.msra.mxu0 0.0
      %544 = vmatpush.msra.mxu0 0.0
      %545 = vmatpush.msra.mxu0 0.0
      %546 = vmatpush.msra.mxu0 0.0
      %547 = vmatpush.msra.mxu0 %v527
      %548 = vmatmul.f32.gmra.mxu0 %v430
      %v549 = vpop.f32.mrf.mxu0
      %v550 = vadd.f32 0.0, %v549
      %551 = vmatmul.f32.gmra.mxu0 %v433
      %v552 = vpop.f32.mrf.mxu0
      %v553 = vadd.f32 0.0, %v552
      %554 = vmatmul.f32.gmra.mxu0 %v436
      %v555 = vpop.f32.mrf.mxu0
      %v556 = vadd.f32 0.0, %v555
      %557 = vmatmul.f32.gmra.mxu0 %v439
      %v558 = vpop.f32.mrf.mxu0
      %v559 = vadd.f32 0.0, %v558
      %560 = vmatmul.f32.gmra.mxu0 %v442
      %v561 = vpop.f32.mrf.mxu0
      %v562 = vadd.f32 0.0, %v561
      %563 = vmatmul.f32.gmra.mxu0 %v445
      %v564 = vpop.f32.mrf.mxu0
      %v565 = vadd.f32 0.0, %v564
      %566 = vmatmul.f32.gmra.mxu0 %v448
      %v567 = vpop.f32.mrf.mxu0
      %v568 = vadd.f32 0.0, %v567
      %569 = vmatmul.f32.gmra.mxu0 %v451
      %v570 = vpop.f32.mrf.mxu0
      %v571 = vadd.f32 0.0, %v570
      %572 = vmatmul.f32.gmra.mxu0 %v454
      %v573 = vpop.f32.mrf.mxu0
      %v574 = vadd.f32 0.0, %v573
      %575 = vmatmul.f32.gmra.mxu0 %v457
      %v576 = vpop.f32.mrf.mxu0
      %v577 = vadd.f32 0.0, %v576
      %578 = vmatmul.f32.gmra.mxu0 %v460
      %v579 = vpop.f32.mrf.mxu0
      %v580 = vadd.f32 0.0, %v579
      %581 = vmatmul.f32.gmra.mxu0 %v463
      %v582 = vpop.f32.mrf.mxu0
      %v583 = vadd.f32 0.0, %v582
      %584 = vmatmul.f32.gmra.mxu0 %v466
      %v585 = vpop.f32.mrf.mxu0
      %v586 = vadd.f32 0.0, %v585
      %587 = vmatmul.f32.gmra.mxu0 %v469
      %v588 = vpop.f32.mrf.mxu0
      %v589 = vadd.f32 0.0, %v588
      %590 = vmatmul.f32.gmra.mxu0 %v472
      %v591 = vpop.f32.mrf.mxu0
      %v592 = vadd.f32 0.0, %v591
      %593 = vmatmul.f32.gmra.mxu0 %v475
      %v594 = vpop.f32.mrf.mxu0
      %v595 = vadd.f32 0.0, %v594
      %596 = vmatmul.f32.gmra.mxu0 %v478
      %v597 = vpop.f32.mrf.mxu0
      %v598 = vadd.f32 0.0, %v597
      %599 = vmatmul.f32.gmra.mxu0 %v481
      %v600 = vpop.f32.mrf.mxu0
      %v601 = vadd.f32 0.0, %v600
      %602 = vmatmul.f32.gmra.mxu0 %v484
      %v603 = vpop.f32.mrf.mxu0
      %v604 = vadd.f32 0.0, %v603
      %605 = vmatmul.f32.gmra.mxu0 %v487
      %v606 = vpop.f32.mrf.mxu0
      %v607 = vadd.f32 0.0, %v606
      %608 = vmatmul.f32.gmra.mxu0 %v490
      %v609 = vpop.f32.mrf.mxu0
      %v610 = vadd.f32 0.0, %v609
      %611 = vmatmul.f32.gmra.mxu0 %v493
      %v612 = vpop.f32.mrf.mxu0
      %v613 = vadd.f32 0.0, %v612
      %614 = vmatmul.f32.gmra.mxu0 %v496
      %v615 = vpop.f32.mrf.mxu0
      %v616 = vadd.f32 0.0, %v615
      %617 = vmatmul.f32.gmra.mxu0 %v499
      %v618 = vpop.f32.mrf.mxu0
      %v619 = vadd.f32 0.0, %v618
      %620 = vmatmul.f32.gmra.mxu0 %v502
      %v621 = vpop.f32.mrf.mxu0
      %v622 = vadd.f32 0.0, %v621
      %623 = vmatmul.f32.gmra.mxu0 %v505
      %v624 = vpop.f32.mrf.mxu0
      %v625 = vadd.f32 0.0, %v624
      %626 = vmatmul.f32.gmra.mxu0 %v508
      %v627 = vpop.f32.mrf.mxu0
      %v628 = vadd.f32 0.0, %v627
      %629 = vmatmul.f32.gmra.mxu0 %v511
      %v630 = vpop.f32.mrf.mxu0
      %v631 = vadd.f32 0.0, %v630
      %632 = vmatmul.f32.gmra.mxu0 %v514
      %v633 = vpop.f32.mrf.mxu0
      %v634 = vadd.f32 0.0, %v633
      %635 = vmatmul.f32.gmra.mxu0 %v517
      %v636 = vpop.f32.mrf.mxu0
      %v637 = vadd.f32 0.0, %v636
      %638 = vmatmul.f32.gmra.mxu0 %v520
      %v639 = vpop.f32.mrf.mxu0
      %v640 = vadd.f32 0.0, %v639
      %641 = vmatmul.f32.gmra.mxu0 %v523
      %v642 = vpop.f32.mrf.mxu0
      %v643 = vadd.f32 0.0, %v642
      %644 = vdwg.mxu0
      %645 = vmatpush.msra.mxu0 0.0
      %646 = vmatpush.msra.mxu0 0.0
      %647 = vmatpush.msra.mxu0 0.0
      %648 = vmatpush.msra.mxu0 0.0
      %649 = vmatpush.msra.mxu0 0.0
      %650 = vmatpush.msra.mxu0 0.0
      %651 = vmatpush.msra.mxu0 0.0
      %652 = vmatpush.msra.mxu0 0.0
      %653 = vmatpush.msra.mxu0 0.0
      %654 = vmatpush.msra.mxu0 0.0
      %655 = vmatpush.msra.mxu0 0.0
      %656 = vmatpush.msra.mxu0 0.0
      %657 = vmatpush.msra.mxu0 0.0
      %658 = vmatpush.msra.mxu0 0.0
      %659 = vmatpush.msra.mxu0 0.0
      %660 = vmatpush.msra.mxu0 %v530
      %661 = vmatmul.f32.gmra.mxu0 %v430
      %v662 = vpop.f32.mrf.mxu0
      %v663 = vadd.f32 0.0, %v662
      %664 = vmatmul.f32.gmra.mxu0 %v433
      %v665 = vpop.f32.mrf.mxu0
      %v666 = vadd.f32 0.0, %v665
      %667 = vmatmul.f32.gmra.mxu0 %v436
      %v668 = vpop.f32.mrf.mxu0
      %v669 = vadd.f32 0.0, %v668
      %670 = vmatmul.f32.gmra.mxu0 %v439
      %v671 = vpop.f32.mrf.mxu0
      %v672 = vadd.f32 0.0, %v671
      %673 = vmatmul.f32.gmra.mxu0 %v442
      %v674 = vpop.f32.mrf.mxu0
      %v675 = vadd.f32 0.0, %v674
      %676 = vmatmul.f32.gmra.mxu0 %v445
      %v677 = vpop.f32.mrf.mxu0
      %v678 = vadd.f32 0.0, %v677
      %679 = vmatmul.f32.gmra.mxu0 %v448
      %v680 = vpop.f32.mrf.mxu0
      %v681 = vadd.f32 0.0, %v680
      %682 = vmatmul.f32.gmra.mxu0 %v451
      %v683 = vpop.f32.mrf.mxu0
      %v684 = vadd.f32 0.0, %v683
      %685 = vmatmul.f32.gmra.mxu0 %v454
      %v686 = vpop.f32.mrf.mxu0
      %v687 = vadd.f32 0.0, %v686
      %688 = vmatmul.f32.gmra.mxu0 %v457
      %v689 = vpop.f32.mrf.mxu0
      %v690 = vadd.f32 0.0, %v689
      %691 = vmatmul.f32.gmra.mxu0 %v460
      %v692 = vpop.f32.mrf.mxu0
      %v693 = vadd.f32 0.0, %v692
      %694 = vmatmul.f32.gmra.mxu0 %v463
      %v695 = vpop.f32.mrf.mxu0
      %v696 = vadd.f32 0.0, %v695
      %697 = vmatmul.f32.gmra.mxu0 %v466
      %v698 = vpop.f32.mrf.mxu0
      %v699 = vadd.f32 0.0, %v698
      %700 = vmatmul.f32.gmra.mxu0 %v469
      %v701 = vpop.f32.mrf.mxu0
      %v702 = vadd.f32 0.0, %v701
      %703 = vmatmul.f32.gmra.mxu0 %v472
      %v704 = vpop.f32.mrf.mxu0
      %v705 = vadd.f32 0.0, %v704
      %706 = vmatmul.f32.gmra.mxu0 %v475
      %v707 = vpop.f32.mrf.mxu0
      %v708 = vadd.f32 0.0, %v707
      %709 = vmatmul.f32.gmra.mxu0 %v478
      %v710 = vpop.f32.mrf.mxu0
      %v711 = vadd.f32 0.0, %v710
      %712 = vmatmul.f32.gmra.mxu0 %v481
      %v713 = vpop.f32.mrf.mxu0
      %v714 = vadd.f32 0.0, %v713
      %715 = vmatmul.f32.gmra.mxu0 %v484
      %v716 = vpop.f32.mrf.mxu0
      %v717 = vadd.f32 0.0, %v716
      %718 = vmatmul.f32.gmra.mxu0 %v487
      %v719 = vpop.f32.mrf.mxu0
      %v720 = vadd.f32 0.0, %v719
      %721 = vmatmul.f32.gmra.mxu0 %v490
      %v722 = vpop.f32.mrf.mxu0
      %v723 = vadd.f32 0.0, %v722
      %724 = vmatmul.f32.gmra.mxu0 %v493
      %v725 = vpop.f32.mrf.mxu0
      %v726 = vadd.f32 0.0, %v725
      %727 = vmatmul.f32.gmra.mxu0 %v496
      %v728 = vpop.f32.mrf.mxu0
      %v729 = vadd.f32 0.0, %v728
      %730 = vmatmul.f32.gmra.mxu0 %v499
      %v731 = vpop.f32.mrf.mxu0
      %v732 = vadd.f32 0.0, %v731
      %733 = vmatmul.f32.gmra.mxu0 %v502
      %v734 = vpop.f32.mrf.mxu0
      %v735 = vadd.f32 0.0, %v734
      %736 = vmatmul.f32.gmra.mxu0 %v505
      %v737 = vpop.f32.mrf.mxu0
      %v738 = vadd.f32 0.0, %v737
      %739 = vmatmul.f32.gmra.mxu0 %v508
      %v740 = vpop.f32.mrf.mxu0
      %v741 = vadd.f32 0.0, %v740
      %742 = vmatmul.f32.gmra.mxu0 %v511
      %v743 = vpop.f32.mrf.mxu0
      %v744 = vadd.f32 0.0, %v743
      %745 = vmatmul.f32.gmra.mxu0 %v514
      %v746 = vpop.f32.mrf.mxu0
      %v747 = vadd.f32 0.0, %v746
      %748 = vmatmul.f32.gmra.mxu0 %v517
      %v749 = vpop.f32.mrf.mxu0
      %v750 = vadd.f32 0.0, %v749
      %751 = vmatmul.f32.gmra.mxu0 %v520
      %v752 = vpop.f32.mrf.mxu0
      %v753 = vadd.f32 0.0, %v752
      %754 = vmatmul.f32.gmra.mxu0 %v523
      %v755 = vpop.f32.mrf.mxu0
      %v756 = vadd.f32 0.0, %v755
      %757 = vdwg.mxu0
      %v758 = vmax.f32 %v550, %v556
      %v759 = vmax.f32 %v553, %v559
      %v760 = vmax.f32 %v758, %v562
      %v761 = vmax.f32 %v759, %v565
      %v762 = vmax.f32 %v760, %v568
      %v763 = vmax.f32 %v761, %v571
      %v764 = vmax.f32 %v762, %v574
      %v765 = vmax.f32 %v763, %v577
      %v766 = vmax.f32 %v764, %v580
      %v767 = vmax.f32 %v765, %v583
      %v768 = vmax.f32 %v766, %v586
      %v769 = vmax.f32 %v767, %v589
      %v770 = vmax.f32 %v768, %v592
      %v771 = vmax.f32 %v769, %v595
      %v772 = vmax.f32 %v770, %v598
      %v773 = vmax.f32 %v771, %v601
      %v774 = vmax.f32 %v772, %v604
      %v775 = vmax.f32 %v773, %v607
      %v776 = vmax.f32 %v774, %v610
      %v777 = vmax.f32 %v775, %v613
      %v778 = vmax.f32 %v776, %v616
      %v779 = vmax.f32 %v777, %v619
      %v780 = vmax.f32 %v778, %v622
      %v781 = vmax.f32 %v779, %v625
      %v782 = vmax.f32 %v780, %v628
      %v783 = vmax.f32 %v781, %v631
      %v784 = vmax.f32 %v782, %v634
      %v785 = vmax.f32 %v783, %v637
      %v786 = vmax.f32 %v784, %v640
      %v787 = vmax.f32 %v785, %v643
      %v788 = vmax.f32 %v786, %v787
      %v789 = vrot.slane %v788, 4
      %v790 = vmax.f32 %v788, %v789
      %v791 = vrot.slane %v790, 2
      %v792 = vmax.f32 %v790, %v791
      %v793 = vrot.slane %v792, 1
      %v794 = vmax.f32 %v792, %v793
      %v795 = vmax.f32 %v663, %v669
      %v796 = vmax.f32 %v666, %v672
      %v797 = vmax.f32 %v795, %v675
      %v798 = vmax.f32 %v796, %v678
      %v799 = vmax.f32 %v797, %v681
      %v800 = vmax.f32 %v798, %v684
      %v801 = vmax.f32 %v799, %v687
      %v802 = vmax.f32 %v800, %v690
      %v803 = vmax.f32 %v801, %v693
      %v804 = vmax.f32 %v802, %v696
      %v805 = vmax.f32 %v803, %v699
      %v806 = vmax.f32 %v804, %v702
      %v807 = vmax.f32 %v805, %v705
      %v808 = vmax.f32 %v806, %v708
      %v809 = vmax.f32 %v807, %v711
      %v810 = vmax.f32 %v808, %v714
      %v811 = vmax.f32 %v809, %v717
      %v812 = vmax.f32 %v810, %v720
      %v813 = vmax.f32 %v811, %v723
      %v814 = vmax.f32 %v812, %v726
      %v815 = vmax.f32 %v813, %v729
      %v816 = vmax.f32 %v814, %v732
      %v817 = vmax.f32 %v815, %v735
      %v818 = vmax.f32 %v816, %v738
      %v819 = vmax.f32 %v817, %v741
      %v820 = vmax.f32 %v818, %v744
      %v821 = vmax.f32 %v819, %v747
      %v822 = vmax.f32 %v820, %v750
      %v823 = vmax.f32 %v821, %v753
      %v824 = vmax.f32 %v822, %v756
      %v825 = vmax.f32 %v823, %v824
      %v826 = vrot.slane %v825, 4
      %v827 = vmax.f32 %v825, %v826
      %v828 = vrot.slane %v827, 2
      %v829 = vmax.f32 %v827, %v828
      %v830 = vrot.slane %v829, 1
      %v831 = vmax.f32 %v829, %v830
      %v832 = vsub.f32 %v550, %v794
      %v833 = vsub.f32 %v663, %v831
      %v834 = vsub.f32 %v553, %v794
      %v835 = vsub.f32 %v666, %v831
      %v836 = vsub.f32 %v556, %v794
      %v837 = vsub.f32 %v669, %v831
      %v838 = vsub.f32 %v559, %v794
      %v839 = vsub.f32 %v672, %v831
      %v840 = vsub.f32 %v562, %v794
      %v841 = vsub.f32 %v675, %v831
      %v842 = vsub.f32 %v565, %v794
      %v843 = vsub.f32 %v678, %v831
      %v844 = vsub.f32 %v568, %v794
      %v845 = vsub.f32 %v681, %v831
      %v846 = vsub.f32 %v571, %v794
      %v847 = vsub.f32 %v684, %v831
      %v848 = vsub.f32 %v574, %v794
      %v849 = vsub.f32 %v687, %v831
      %v850 = vsub.f32 %v577, %v794
      %v851 = vsub.f32 %v690, %v831
      %v852 = vsub.f32 %v580, %v794
      %v853 = vsub.f32 %v693, %v831
      %v854 = vsub.f32 %v583, %v794
      %v855 = vsub.f32 %v696, %v831
      %v856 = vsub.f32 %v586, %v794
      %v857 = vsub.f32 %v699, %v831
      %v858 = vsub.f32 %v589, %v794
      %v859 = vsub.f32 %v702, %v831
      %v860 = vsub.f32 %v592, %v794
      %v861 = vsub.f32 %v705, %v831
      %v862 = vsub.f32 %v595, %v794
      %v863 = vsub.f32 %v708, %v831
      %v864 = vsub.f32 %v598, %v794
      %v865 = vsub.f32 %v711, %v831
      %v866 = vsub.f32 %v601, %v794
      %v867 = vsub.f32 %v714, %v831
      %v868 = vsub.f32 %v604, %v794
      %v869 = vsub.f32 %v717, %v831
      %v870 = vsub.f32 %v607, %v794
      %v871 = vsub.f32 %v720, %v831
      %v872 = vsub.f32 %v610, %v794
      %v873 = vsub.f32 %v723, %v831
      %v874 = vsub.f32 %v613, %v794
      %v875 = vsub.f32 %v726, %v831
      %v876 = vsub.f32 %v616, %v794
      %v877 = vsub.f32 %v729, %v831
      %v878 = vsub.f32 %v619, %v794
      %v879 = vsub.f32 %v732, %v831
      %v880 = vsub.f32 %v622, %v794
      %v881 = vsub.f32 %v735, %v831
      %v882 = vsub.f32 %v625, %v794
      %v883 = vsub.f32 %v738, %v831
      %v884 = vsub.f32 %v628, %v794
      %v885 = vsub.f32 %v741, %v831
      %v886 = vsub.f32 %v631, %v794
      %v887 = vsub.f32 %v744, %v831
      %v888 = vsub.f32 %v634, %v794
      %v889 = vsub.f32 %v747, %v831
      %v890 = vsub.f32 %v637, %v794
      %v891 = vsub.f32 %v750, %v831
      %v892 = vsub.f32 %v640, %v794
      %v893 = vsub.f32 %v753, %v831
      %v894 = vsub.f32 %v643, %v794
      %v895 = vsub.f32 %v756, %v831
      %v896 = vmul.f32 %v832, 1.442695
      %v897 = vpow.pop %v896
      %v898 = vmul.f32 %v833, 1.442695
      %v899 = vpow.pop %v898
      %v900 = vmul.f32 %v834, 1.442695
      %v901 = vpow.pop %v900
      %v902 = vmul.f32 %v835, 1.442695
      %v903 = vpow.pop %v902
      %v904 = vmul.f32 %v836, 1.442695
      %v905 = vpow.pop %v904
      %v906 = vmul.f32 %v837, 1.442695
      %v907 = vpow.pop %v906
      %v908 = vmul.f32 %v838, 1.442695
      %v909 = vpow.pop %v908
      %v910 = vmul.f32 %v839, 1.442695
      %v911 = vpow.pop %v910
      %v912 = vmul.f32 %v840, 1.442695
      %v913 = vpow.pop %v912
      %v914 = vmul.f32 %v841, 1.442695
      %v915 = vpow.pop %v914
      %v916 = vmul.f32 %v842, 1.442695
      %v917 = vpow.pop %v916
      %v918 = vmul.f32 %v843, 1.442695
      %v919 = vpow.pop %v918
      %v920 = vmul.f32 %v844, 1.442695
      %v921 = vpow.pop %v920
      %v922 = vmul.f32 %v845, 1.442695
      %v923 = vpow.pop %v922
      %v924 = vmul.f32 %v846, 1.442695
      %v925 = vpow.pop %v924
      %v926 = vmul.f32 %v847, 1.442695
      %v927 = vpow.pop %v926
      %v928 = vmul.f32 %v848, 1.442695
      %v929 = vpow.pop %v928
      %v930 = vmul.f32 %v849, 1.442695
      %v931 = vpow.pop %v930
      %v932 = vmul.f32 %v850, 1.442695
      %v933 = vpow.pop %v932
      %v934 = vmul.f32 %v851, 1.442695
      %v935 = vpow.pop %v934
      %v936 = vmul.f32 %v852, 1.442695
      %v937 = vpow.pop %v936
      %v938 = vmul.f32 %v853, 1.442695
      %v939 = vpow.pop %v938
      %v940 = vmul.f32 %v854, 1.442695
      %v941 = vpow.pop %v940
      %v942 = vmul.f32 %v855, 1.442695
      %v943 = vpow.pop %v942
      %v944 = vmul.f32 %v856, 1.442695
      %v945 = vpow.pop %v944
      %v946 = vmul.f32 %v857, 1.442695
      %v947 = vpow.pop %v946
      %v948 = vmul.f32 %v858, 1.442695
      %v949 = vpow.pop %v948
      %v950 = vmul.f32 %v859, 1.442695
      %v951 = vpow.pop %v950
      %v952 = vmul.f32 %v860, 1.442695
      %v953 = vpow.pop %v952
      %v954 = vmul.f32 %v861, 1.442695
      %v955 = vpow.pop %v954
      %v956 = vmul.f32 %v862, 1.442695
      %v957 = vpow.pop %v956
      %v958 = vmul.f32 %v863, 1.442695
      %v959 = vpow.pop %v958
      %v960 = vmul.f32 %v864, 1.442695
      %v961 = vpow.pop %v960
      %v962 = vmul.f32 %v865, 1.442695
      %v963 = vpow.pop %v962
      %v964 = vmul.f32 %v866, 1.442695
      %v965 = vpow.pop %v964
      %v966 = vmul.f32 %v867, 1.442695
      %v967 = vpow.pop %v966
      %v968 = vmul.f32 %v868, 1.442695
      %v969 = vpow.pop %v968
      %v970 = vmul.f32 %v869, 1.442695
      %v971 = vpow.pop %v970
      %v972 = vmul.f32 %v870, 1.442695
      %v973 = vpow.pop %v972
      %v974 = vmul.f32 %v871, 1.442695
      %v975 = vpow.pop %v974
      %v976 = vmul.f32 %v872, 1.442695
      %v977 = vpow.pop %v976
      %v978 = vmul.f32 %v873, 1.442695
      %v979 = vpow.pop %v978
      %v980 = vmul.f32 %v874, 1.442695
      %v981 = vpow.pop %v980
      %v982 = vmul.f32 %v875, 1.442695
      %v983 = vpow.pop %v982
      %v984 = vmul.f32 %v876, 1.442695
      %v985 = vpow.pop %v984
      %v986 = vmul.f32 %v877, 1.442695
      %v987 = vpow.pop %v986
      %v988 = vmul.f32 %v878, 1.442695
      %v989 = vpow.pop %v988
      %v990 = vmul.f32 %v879, 1.442695
      %v991 = vpow.pop %v990
      %v992 = vmul.f32 %v880, 1.442695
      %v993 = vpow.pop %v992
      %v994 = vmul.f32 %v881, 1.442695
      %v995 = vpow.pop %v994
      %v996 = vmul.f32 %v882, 1.442695
      %v997 = vpow.pop %v996
      %v998 = vmul.f32 %v883, 1.442695
      %v999 = vpow.pop %v998
      %v1000 = vmul.f32 %v884, 1.442695
      %v1001 = vpow.pop %v1000
      %v1002 = vmul.f32 %v885, 1.442695
      %v1003 = vpow.pop %v1002
      %v1004 = vmul.f32 %v886, 1.442695
      %v1005 = vpow.pop %v1004
      %v1006 = vmul.f32 %v887, 1.442695
      %v1007 = vpow.pop %v1006
      %v1008 = vmul.f32 %v888, 1.442695
      %v1009 = vpow.pop %v1008
      %v1010 = vmul.f32 %v889, 1.442695
      %v1011 = vpow.pop %v1010
      %v1012 = vmul.f32 %v890, 1.442695
      %v1013 = vpow.pop %v1012
      %v1014 = vmul.f32 %v891, 1.442695
      %v1015 = vpow.pop %v1014
      %v1016 = vmul.f32 %v892, 1.442695
      %v1017 = vpow.pop %v1016
      %v1018 = vmul.f32 %v893, 1.442695
      %v1019 = vpow.pop %v1018
      %v1020 = vmul.f32 %v894, 1.442695
      %v1021 = vpow.pop %v1020
      %v1022 = vmul.f32 %v895, 1.442695
      %v1023 = vpow.pop %v1022
      %v1024 = vadd.f32 %v897, %v901
      %v1025 = vadd.f32 %v1024, %v905
      %v1026 = vadd.f32 %v1025, %v909
      %v1027 = vadd.f32 %v1026, %v913
      %v1028 = vadd.f32 %v1027, %v917
      %v1029 = vadd.f32 %v1028, %v921
      %v1030 = vadd.f32 %v1029, %v925
      %v1031 = vadd.f32 %v1030, %v929
      %v1032 = vadd.f32 %v1031, %v933
      %v1033 = vadd.f32 %v1032, %v937
      %v1034 = vadd.f32 %v1033, %v941
      %v1035 = vadd.f32 %v1034, %v945
      %v1036 = vadd.f32 %v1035, %v949
      %v1037 = vadd.f32 %v1036, %v953
      %v1038 = vadd.f32 %v1037, %v957
      %v1039 = vadd.f32 %v1038, %v961
      %v1040 = vadd.f32 %v1039, %v965
      %v1041 = vadd.f32 %v1040, %v969
      %v1042 = vadd.f32 %v1041, %v973
      %v1043 = vadd.f32 %v1042, %v977
      %v1044 = vadd.f32 %v1043, %v981
      %v1045 = vadd.f32 %v1044, %v985
      %v1046 = vadd.f32 %v1045, %v989
      %v1047 = vadd.f32 %v1046, %v993
      %v1048 = vadd.f32 %v1047, %v997
      %v1049 = vadd.f32 %v1048, %v1001
      %v1050 = vadd.f32 %v1049, %v1005
      %v1051 = vadd.f32 %v1050, %v1009
      %v1052 = vadd.f32 %v1051, %v1013
      %v1053 = vadd.f32 %v1052, %v1017
      %v1054 = vadd.f32 %v1053, %v1021
      %v1055 = vrot.slane %v1054, 4
      %v1056 = vadd.f32 %v1054, %v1055
      %v1057 = vrot.slane %v1056, 2
      %v1058 = vadd.f32 %v1056, %v1057
      %v1059 = vrot.slane %v1058, 1
      %v1060 = vadd.f32 %v1058, %v1059
      %v1061 = vadd.f32 %v899, %v903
      %v1062 = vadd.f32 %v1061, %v907
      %v1063 = vadd.f32 %v1062, %v911
      %v1064 = vadd.f32 %v1063, %v915
      %v1065 = vadd.f32 %v1064, %v919
      %v1066 = vadd.f32 %v1065, %v923
      %v1067 = vadd.f32 %v1066, %v927
      %v1068 = vadd.f32 %v1067, %v931
      %v1069 = vadd.f32 %v1068, %v935
      %v1070 = vadd.f32 %v1069, %v939
      %v1071 = vadd.f32 %v1070, %v943
      %v1072 = vadd.f32 %v1071, %v947
      %v1073 = vadd.f32 %v1072, %v951
      %v1074 = vadd.f32 %v1073, %v955
      %v1075 = vadd.f32 %v1074, %v959
      %v1076 = vadd.f32 %v1075, %v963
      %v1077 = vadd.f32 %v1076, %v967
      %v1078 = vadd.f32 %v1077, %v971
      %v1079 = vadd.f32 %v1078, %v975
      %v1080 = vadd.f32 %v1079, %v979
      %v1081 = vadd.f32 %v1080, %v983
      %v1082 = vadd.f32 %v1081, %v987
      %v1083 = vadd.f32 %v1082, %v991
      %v1084 = vadd.f32 %v1083, %v995
      %v1085 = vadd.f32 %v1084, %v999
      %v1086 = vadd.f32 %v1085, %v1003
      %v1087 = vadd.f32 %v1086, %v1007
      %v1088 = vadd.f32 %v1087, %v1011
      %v1089 = vadd.f32 %v1088, %v1015
      %v1090 = vadd.f32 %v1089, %v1019
      %v1091 = vadd.f32 %v1090, %v1023
      %v1092 = vrot.slane %v1091, 4
      %v1093 = vadd.f32 %v1091, %v1092
      %v1094 = vrot.slane %v1093, 2
      %v1095 = vadd.f32 %v1093, %v1094
      %v1096 = vrot.slane %v1095, 1
      %v1097 = vadd.f32 %v1095, %v1096
      %v1100 = vrot.slane %v394, 4
      %v1101 = vrot.slane %v395, 4
      %1104 = vmatpush.msra.mxu0 %v957
      %1105 = vmatpush.msra.mxu0 %v953
      %1106 = vmatpush.msra.mxu0 %v949
      %1107 = vmatpush.msra.mxu0 %v945
      %1108 = vmatpush.msra.mxu0 %v941
      %1109 = vmatpush.msra.mxu0 %v937
      %1110 = vmatpush.msra.mxu0 %v933
      %1111 = vmatpush.msra.mxu0 %v929
      %1112 = vmatpush.msra.mxu0 %v925
      %1113 = vmatpush.msra.mxu0 %v921
      %1114 = vmatpush.msra.mxu0 %v917
      %1115 = vmatpush.msra.mxu0 %v913
      %1116 = vmatpush.msra.mxu0 %v909
      %1117 = vmatpush.msra.mxu0 %v905
      %1118 = vmatpush.msra.mxu0 %v901
      %1119 = vmatpush.msra.mxu0 %v897
      %1120 = vmatmul.f32.gmra.mxu0 %v1100
      %v1121 = vpop.f32.mrf.mxu0
      %v1122 = vadd.f32 0.0, %v1121
      %1123 = vdwg.mxu0
      %1124 = vmatpush.msra.mxu0 %v1021
      %1125 = vmatpush.msra.mxu0 %v1017
      %1126 = vmatpush.msra.mxu0 %v1013
      %1127 = vmatpush.msra.mxu0 %v1009
      %1128 = vmatpush.msra.mxu0 %v1005
      %1129 = vmatpush.msra.mxu0 %v1001
      %1130 = vmatpush.msra.mxu0 %v997
      %1131 = vmatpush.msra.mxu0 %v993
      %1132 = vmatpush.msra.mxu0 %v989
      %1133 = vmatpush.msra.mxu0 %v985
      %1134 = vmatpush.msra.mxu0 %v981
      %1135 = vmatpush.msra.mxu0 %v977
      %1136 = vmatpush.msra.mxu0 %v973
      %1137 = vmatpush.msra.mxu0 %v969
      %1138 = vmatpush.msra.mxu0 %v965
      %1139 = vmatpush.msra.mxu0 %v961
      %1140 = vmatmul.f32.gmra.mxu0 %v1101
      %v1141 = vpop.f32.mrf.mxu0
      %v1142 = vadd.f32 %v1122, %v1141
      %1143 = vdwg.mxu0
      %1144 = vmatpush.msra.mxu0 %v959
      %1145 = vmatpush.msra.mxu0 %v955
      %1146 = vmatpush.msra.mxu0 %v951
      %1147 = vmatpush.msra.mxu0 %v947
      %1148 = vmatpush.msra.mxu0 %v943
      %1149 = vmatpush.msra.mxu0 %v939
      %1150 = vmatpush.msra.mxu0 %v935
      %1151 = vmatpush.msra.mxu0 %v931
      %1152 = vmatpush.msra.mxu0 %v927
      %1153 = vmatpush.msra.mxu0 %v923
      %1154 = vmatpush.msra.mxu0 %v919
      %1155 = vmatpush.msra.mxu0 %v915
      %1156 = vmatpush.msra.mxu0 %v911
      %1157 = vmatpush.msra.mxu0 %v907
      %1158 = vmatpush.msra.mxu0 %v903
      %1159 = vmatpush.msra.mxu0 %v899
      %1160 = vmatmul.f32.gmra.mxu0 %v1100
      %v1161 = vpop.f32.mrf.mxu0
      %v1162 = vadd.f32 0.0, %v1161
      %1163 = vdwg.mxu0
      %1164 = vmatpush.msra.mxu0 %v1023
      %1165 = vmatpush.msra.mxu0 %v1019
      %1166 = vmatpush.msra.mxu0 %v1015
      %1167 = vmatpush.msra.mxu0 %v1011
      %1168 = vmatpush.msra.mxu0 %v1007
      %1169 = vmatpush.msra.mxu0 %v1003
      %1170 = vmatpush.msra.mxu0 %v999
      %1171 = vmatpush.msra.mxu0 %v995
      %1172 = vmatpush.msra.mxu0 %v991
      %1173 = vmatpush.msra.mxu0 %v987
      %1174 = vmatpush.msra.mxu0 %v983
      %1175 = vmatpush.msra.mxu0 %v979
      %1176 = vmatpush.msra.mxu0 %v975
      %1177 = vmatpush.msra.mxu0 %v971
      %1178 = vmatpush.msra.mxu0 %v967
      %1179 = vmatpush.msra.mxu0 %v963
      %1180 = vmatmul.f32.gmra.mxu0 %v1101
      %v1181 = vpop.f32.mrf.mxu0
      %v1182 = vadd.f32 %v1162, %v1181
      %1183 = vdwg.mxu0
      %v1184 = vrcp.pop %v1060
      %v1185 = vmul.f32 %v1060, %v1184
      %v1186 = vsub.f32 1.0, %v1185
      %v1187 = vmul.f32 %v1184, %v1186
      %v1188 = vadd.f32 %v1184, %v1187
      %vm1189 = vweird.f32 %v1060
      %vm1190 = vweird.f32 %v1184
      %vm1191 = vmor %vm1189, %vm1190
      %v1192 = vsel %vm1191, %v1184, %v1188
      %v1193 = vand.u32 2147483647, %v1060
      %vm1194 = vcmp.eq.f32.partialorder %v1193, 8.507059e+37
      %v1195 = vand.u32 %v1060, 2147483648
      %v1196 = vor.u32 1.1754944e-38, %v1195
      %v1197 = vsel %vm1194, %v1196, %v1192
      %v1198 = vrcp.pop %v1097
      %v1199 = vmul.f32 %v1097, %v1198
      %v1200 = vsub.f32 1.0, %v1199
      %v1201 = vmul.f32 %v1198, %v1200
      %v1202 = vadd.f32 %v1198, %v1201
      %vm1203 = vweird.f32 %v1097
      %vm1204 = vweird.f32 %v1198
      %vm1205 = vmor %vm1203, %vm1204
      %v1206 = vsel %vm1205, %v1198, %v1202
      %v1207 = vand.u32 2147483647, %v1097
      %vm1208 = vcmp.eq.f32.partialorder %v1207, 8.507059e+37
      %v1209 = vand.u32 %v1097, 2147483648
      %v1210 = vor.u32 1.1754944e-38, %v1209
      %v1211 = vsel %vm1208, %v1210, %v1206
      %v1212 = vmul.f32 %v1142, %v1197
      %v1213 = vmul.f32 %v1182, %v1211
      %v1216 = vrot.slane %v1213, 4
      %v1217 = vsel %vm525, %v1212, %v1216
      %1219 = vst [vmem:[%s192] sm:$0xff] %v1217
      %s1220 = smul.u32 2, %s19
      %p1221 = scmp.lt.s32.totalorder %s18, 1
      %s1222 = scalar_select %p1221, %s18, 1
      %p1223 = scmp.lt.s32.totalorder %s1220, 1
      %s1224 = scalar_select %p1223, %s1220, 1
      %s1225 = smul.addr %s1222, 2
      %s1226 = sadd.s32 %s1224, %s1225
      %s1227 = smul.addr %s1226, 4
      %s1228 = scalar_lea.vmem %s3, %s1227
      // Predicated region
      $region37: #{self_attention_forward.1} parent=31 // pred_check
        %p1229 = pneg %p114
      $region38: #{self_attention_forward.1} parent=31 // pred_check_branch
        %1231 = sbr.rel (%p1229) target = $region40
      $region39: #{self_attention_forward.1} parent=31 // pred_region
        %s1232 = smul.u32 2, %s19
      $region40: #{self_attention_forward.1} parent=31 // pred_fallthru
        _
    $region32: #{self_attention_forward.1} parent=5 // pred_fallthru
      _
    %p1233 = scmp.le.s32.totalorder 2, %s9
    // Predicated region
    $region41: #{self_attention_forward.1} parent=5 // pred_check
      %p1234 = pneg %p1233
    $region42: #{self_attention_forward.1} parent=5 // pred_check_branch
      %1236 = sbr.rel (%p1234) target = $region44
    $region43: #{self_attention_forward.1} parent=5 // pred_region
      %s1237 = ssub.s32 %s9, 2
      // Predicated region
      $region45: #{self_attention_forward.1} parent=43 // pred_check
        %p1238 = pneg %p120
      $region46: #{self_attention_forward.1} parent=43 // pred_check_branch
        %1240 = sbr.rel (%p1238) target = $region48
      $region47: #{self_attention_forward.1} parent=43 // pred_region
        %s1241 = smul.u32 2, %s21
        %p1242 = scmp.lt.s32.totalorder %s20, 1
        %s1243 = scalar_select %p1242, %s20, 1
        %p1244 = scmp.lt.s32.totalorder %s1241, 1
        %s1245 = scalar_select %p1244, %s1241, 1
        %s1246 = smul.addr %s1243, 2
        %s1247 = sadd.s32 %s1245, %s1246
        %s1248 = smul.addr %s1247, 4
        %s1249 = scalar_lea.vmem %s3, %s1248
      $region48: #{self_attention_forward.1} parent=43 // pred_fallthru
        _
    $region44: #{self_attention_forward.1} parent=5 // pred_fallthru
      _
  $region6: #{self_attention_forward.1} parent=0 // loop_footer
    %s13 = sadd.s32 1, %s9
  $region7: #{self_attention_forward.1} parent=0 // loop_footer_branch
    %8 = sbr.rel target = $region3
  $region8: #{self_attention_forward.1} parent=0 // loop_exit
    _

</llo_original>
